<compile_context>
chip_gen: v7x
topology: tpu7x:2x2x1
jax: 0.10.0
libtpu: 0.0.40
codegen_flags: <defaults>
</compile_context>

<pallas_src>
import jax
import jax.numpy as jnp
from jax.experimental import pallas as pl
from jax.experimental.pallas import tpu as pltpu


OUT_PAD = 128  # lane-dense output width (>= action_n, multiple of 128 lanes)


def mlp_kernel(x_ref, w1_ref, b1_ref, w2_ref, b2_ref, w3_ref, b3_ref, o_ref):
    # linear1 + ReLU  (bf16 MXU inputs, f32 accumulate, f32 elementwise)
    h = jnp.dot(x_ref[...].astype(jnp.bfloat16), w1_ref[...],
                preferred_element_type=jnp.float32)
    h = jnp.maximum(h + b1_ref[...], 0.0)
    # linear2 + ReLU
    h = jnp.dot(h.astype(jnp.bfloat16), w2_ref[...],
                preferred_element_type=jnp.float32)
    h = jnp.maximum(h + b2_ref[...], 0.0)
    # linear3 (Q-values, no activation); out-features zero-padded to 128 lanes
    q = jnp.dot(h.astype(jnp.bfloat16), w3_ref[...],
                preferred_element_type=jnp.float32)
    o_ref[...] = (q + b3_ref[...]).astype(o_ref.dtype)


def _round_up(x, m):
    return ((x + m - 1) // m) * m


def _select_tile(batch, tb_max):
    """Pick (tile_rows, num_steps, padded_batch).

    Keeps the grid length even when >1 (v7x megacore balance) and only pads
    the batch up to steps*tile (a handful of rows), never a whole extra tile.
    """
    batch8 = _round_up(batch, 8)
    steps = -(-batch8 // tb_max)            # ceil div
    if steps > 1 and steps % 2 == 1:
        steps += 1                          # even grid -> balanced on v7x
    tb_eff = _round_up(-(-batch8 // steps), 8)
    batch_final = steps * tb_eff
    return tb_eff, steps, batch_final


def prepare_params(params, out_pad=OUT_PAD):
    """One-time weight prep: bf16 MXU operands + lane-padded layer 3.

    Hoisted out of nn_forward so the per-call path dispatches no extra XLA ops.
    """
    w1, b1, w2, b2, w3, b3 = params
    hidden = w1.shape[1]
    action_n = w3.shape[1]
    w3p = jnp.zeros((hidden, out_pad), jnp.bfloat16).at[:, :action_n].set(
        w3.astype(jnp.bfloat16))
    b3p = jnp.zeros((1, out_pad), jnp.float32).at[:, :action_n].set(b3)
    return (w1.astype(jnp.bfloat16), b1,
            w2.astype(jnp.bfloat16), b2,
            w3p, b3p)


def nn_forward(state, prepared, action_n, tb=4096):
    """Pallas forward of the Q-network. `prepared` comes from prepare_params."""
    w1b, b1, w2b, b2, w3b, b3p = prepared
    batch, state_dim = state.shape
    hidden = w1b.shape[1]
    out_pad = w3b.shape[1]

    tb_eff, steps, batch_final = _select_tile(batch, tb)
    x = state if batch_final == batch else jnp.pad(
        state, ((0, batch_final - batch), (0, 0)))

    resident = lambda i: (0, 0)  # same block every step -> stays in VMEM

    flops = 2 * batch_final * (state_dim * hidden + hidden * hidden
                               + hidden * out_pad)
    bytes_accessed = (batch_final * state_dim * 4            # f32 input
                      + batch_final * out_pad * 2            # bf16 output
                      + (state_dim * hidden + hidden * hidden
                         + hidden * out_pad) * 2             # bf16 weights
                      + (2 * hidden + out_pad) * 4)          # f32 biases

    out = pl.pallas_call(
        mlp_kernel,
        out_shape=jax.ShapeDtypeStruct((batch_final, out_pad), jnp.bfloat16),
        grid=(steps,),
        in_specs=[
            pl.BlockSpec((tb_eff, state_dim), lambda i: (i, 0)),  # batch-tiled
            pl.BlockSpec((state_dim, hidden), resident),          # W1
            pl.BlockSpec((1, hidden), resident),                  # b1
            pl.BlockSpec((hidden, hidden), resident),             # W2
            pl.BlockSpec((1, hidden), resident),                  # b2
            pl.BlockSpec((hidden, out_pad), resident),            # W3 (padded)
            pl.BlockSpec((1, out_pad), resident),                 # b3 (padded)
        ],
        out_specs=pl.BlockSpec((tb_eff, out_pad), lambda i: (i, 0)),
        compiler_params=pltpu.CompilerParams(
            dimension_semantics=("parallel",)),  # batch axis -> v7x megacore
        cost_estimate=pl.CostEstimate(flops=flops, transcendentals=0,
                                      bytes_accessed=bytes_accessed),
    )(x, w1b, b1, w2b, b2, w3b, b3p)

    return out[:batch, :action_n].astype(jnp.float32)


def init_params(key, state_dim, action_n, hidden=32):
    """Deterministic init mimicking nn.Linear's uniform(-1/sqrt(in), 1/sqrt(in))."""
    keys = jax.random.split(key, 6)

    def linear(kw, kb, fan_in, fan_out):
        bound = 1.0 / jnp.sqrt(jnp.float32(fan_in))
        # stored transposed: (in, out)
        w = jax.random.uniform(kw, (fan_in, fan_out), jnp.float32, -bound, bound)
        b = jax.random.uniform(kb, (1, fan_out), jnp.float32, -bound, bound)
        return w, b

    w1, b1 = linear(keys[0], keys[1], state_dim, hidden)
    w2, b2 = linear(keys[2], keys[3], hidden, hidden)
    w3, b3 = linear(keys[4], keys[5], hidden, action_n)
    return (w1, b1, w2, b2, w3, b3)


def ref_forward(state, params, bf16_inputs=True):
    """Pure-JAX reference; bf16_inputs=True matches the kernel's MXU math."""
    w1, b1, w2, b2, w3, b3 = params
    if bf16_inputs:
        dot = lambda a, w: jnp.dot(a.astype(jnp.bfloat16), w.astype(jnp.bfloat16),
                                   preferred_element_type=jnp.float32)
    else:
        dot = lambda a, w: jnp.dot(a, w, preferred_element_type=jnp.float32)
    h = jnp.maximum(dot(state, w1) + b1, 0.0)
    h = jnp.maximum(dot(h, w2) + b2, 0.0)
    return dot(h, w3) + b3


if __name__ == "__main__":
    # CartPole-v1: state_dim = 4, action_n = 2
    state_dim, action_n, hidden = 4, 2, 32

    key = jax.random.PRNGKey(0)
    k_params, k_small, k_mid, k_big = jax.random.split(key, 4)
    params = init_params(k_params, state_dim, action_n, hidden)
    prepared = prepare_params(params)          # one-time weight prep (hoisted)

    fwd = jax.jit(nn_forward, static_argnames=("action_n", "tb"))

    # --- small batch (single grid step) ---
    batch = 8
    state = jax.random.normal(k_small, (batch, state_dim), dtype=jnp.float32)
    qvalues = fwd(state, prepared, action_n=action_n)
    jax.block_until_ready(qvalues)

    assert qvalues.shape == (batch, action_n)
    ref_b = ref_forward(state, params, bf16_inputs=True)    # matched bf16 math
    ref_f = ref_forward(state, params, bf16_inputs=False)   # full f32
    assert jnp.allclose(qvalues, ref_b, atol=1e-2, rtol=1e-2)
    assert jnp.allclose(qvalues, ref_f, atol=5e-2, rtol=5e-2)

    # --- medium batch: 1000 rows -> single grid step, no padding needed ---
    mid_batch = 1000
    mid_state = jax.random.normal(k_mid, (mid_batch, state_dim), dtype=jnp.float32)
    mid_q = fwd(mid_state, prepared, action_n=action_n)
    jax.block_until_ready(mid_q)
    assert mid_q.shape == (mid_batch, action_n)
    assert jnp.allclose(mid_q, ref_forward(mid_state, params, bf16_inputs=True),
                        atol=1e-2, rtol=1e-2)

    # --- larger batch: 5000 rows -> 2 balanced grid steps + tiny (8-row) pad ---
    big_batch = 5000
    big_state = jax.random.normal(k_big, (big_batch, state_dim), dtype=jnp.float32)
    big_q = fwd(big_state, prepared, action_n=action_n)
    jax.block_until_ready(big_q)
    assert big_q.shape == (big_batch, action_n)
    assert jnp.allclose(big_q, ref_forward(big_state, params, bf16_inputs=True),
                        atol=1e-2, rtol=1e-2)

    print("KERNEL_OK")
</pallas_src>

<mosaic_0001>
module attributes {stable_mosaic.version = 11 : i64} {
  func.func @mlp_kernel(%arg0: i32, %arg1: memref<8x4xf32, #tpu.memory_space<vmem>>, %arg2: memref<4x32xbf16, #tpu.memory_space<vmem>>, %arg3: memref<1x32xf32, #tpu.memory_space<vmem>>, %arg4: memref<32x32xbf16, #tpu.memory_space<vmem>>, %arg5: memref<1x32xf32, #tpu.memory_space<vmem>>, %arg6: memref<32x128xbf16, #tpu.memory_space<vmem>>, %arg7: memref<1x128xf32, #tpu.memory_space<vmem>>, %arg8: memref<8x128xbf16, #tpu.memory_space<vmem>>) attributes {dimension_semantics = [#tpu.dimension_semantics<parallel>], iteration_bounds = array<i64: 1>, scalar_prefetch = 0 : i64, scratch_operands = 0 : i64, tpu.core_type = #tpu.core_type<tc>, window_params = [{transform_indices = @transform_0, window_bounds = array<i64: 8, 4>}, {pipeline_mode = #tpu.pipeline_mode<synchronous>, transform_indices = @transform_1, window_bounds = array<i64: 4, 32>}, {pipeline_mode = #tpu.pipeline_mode<synchronous>, transform_indices = @transform_2, window_bounds = array<i64: 1, 32>}, {pipeline_mode = #tpu.pipeline_mode<synchronous>, transform_indices = @transform_3, window_bounds = array<i64: 32, 32>}, {pipeline_mode = #tpu.pipeline_mode<synchronous>, transform_indices = @transform_4, window_bounds = array<i64: 1, 32>}, {pipeline_mode = #tpu.pipeline_mode<synchronous>, transform_indices = @transform_5, window_bounds = array<i64: 32, 128>}, {pipeline_mode = #tpu.pipeline_mode<synchronous>, transform_indices = @transform_6, window_bounds = array<i64: 1, 128>}, {transform_indices = @transform_7, window_bounds = array<i64: 8, 128>}]} {
    %c0 = arith.constant 0 : index
    %c0_0 = arith.constant 0 : index
    %0 = vector.load %arg1[%c0, %c0_0] : memref<8x4xf32, #tpu.memory_space<vmem>>, vector<8x4xf32>
    %1 = arith.truncf %0 : vector<8x4xf32> to vector<8x4xbf16>
    %c0_1 = arith.constant 0 : index
    %c0_2 = arith.constant 0 : index
    %2 = vector.load %arg2[%c0_1, %c0_2] : memref<4x32xbf16, #tpu.memory_space<vmem>>, vector<4x32xbf16>
    %cst = arith.constant dense<0.000000e+00> : vector<8x32xf32>
    %3 = tpu.matmul %1, %2, %cst {dimension_numbers = #tpu.dot_dimension_numbers<[1], [0], [0], [1], [0, 0, 1, 1], [], []>} : vector<8x4xbf16>, vector<4x32xbf16>, vector<8x32xf32> -> vector<8x32xf32>
    %c0_3 = arith.constant 0 : index
    %c0_4 = arith.constant 0 : index
    %4 = vector.load %arg3[%c0_3, %c0_4] : memref<1x32xf32, #tpu.memory_space<vmem>>, vector<1x32xf32>
    %5 = vector.broadcast %4 : vector<1x32xf32> to vector<8x32xf32>
    %6 = arith.addf %3, %5 : vector<8x32xf32>
    %cst_5 = arith.constant 0.000000e+00 : f32
    %7 = vector.broadcast %cst_5 : f32 to vector<8x32xf32>
    %8 = arith.maximumf %6, %7 : vector<8x32xf32>
    %9 = arith.truncf %8 : vector<8x32xf32> to vector<8x32xbf16>
    %c0_6 = arith.constant 0 : index
    %c0_7 = arith.constant 0 : index
    %10 = vector.load %arg4[%c0_6, %c0_7] : memref<32x32xbf16, #tpu.memory_space<vmem>>, vector<32x32xbf16>
    %cst_8 = arith.constant dense<0.000000e+00> : vector<8x32xf32>
    %11 = tpu.matmul %9, %10, %cst_8 {dimension_numbers = #tpu.dot_dimension_numbers<[1], [0], [0], [1], [0, 0, 1, 1], [], []>} : vector<8x32xbf16>, vector<32x32xbf16>, vector<8x32xf32> -> vector<8x32xf32>
    %c0_9 = arith.constant 0 : index
    %c0_10 = arith.constant 0 : index
    %12 = vector.load %arg5[%c0_9, %c0_10] : memref<1x32xf32, #tpu.memory_space<vmem>>, vector<1x32xf32>
    %13 = vector.broadcast %12 : vector<1x32xf32> to vector<8x32xf32>
    %14 = arith.addf %11, %13 : vector<8x32xf32>
    %cst_11 = arith.constant 0.000000e+00 : f32
    %15 = vector.broadcast %cst_11 : f32 to vector<8x32xf32>
    %16 = arith.maximumf %14, %15 : vector<8x32xf32>
    %17 = arith.truncf %16 : vector<8x32xf32> to vector<8x32xbf16>
    %c0_12 = arith.constant 0 : index
    %c0_13 = arith.constant 0 : index
    %18 = vector.load %arg6[%c0_12, %c0_13] : memref<32x128xbf16, #tpu.memory_space<vmem>>, vector<32x128xbf16>
    %cst_14 = arith.constant dense<0.000000e+00> : vector<8x128xf32>
    %19 = tpu.matmul %17, %18, %cst_14 {dimension_numbers = #tpu.dot_dimension_numbers<[1], [0], [0], [1], [0, 0, 1, 1], [], []>} : vector<8x32xbf16>, vector<32x128xbf16>, vector<8x128xf32> -> vector<8x128xf32>
    %c0_15 = arith.constant 0 : index
    %c0_16 = arith.constant 0 : index
    %20 = vector.load %arg7[%c0_15, %c0_16] : memref<1x128xf32, #tpu.memory_space<vmem>>, vector<1x128xf32>
    %21 = vector.broadcast %20 : vector<1x128xf32> to vector<8x128xf32>
    %22 = arith.addf %19, %21 : vector<8x128xf32>
    %23 = arith.truncf %22 : vector<8x128xf32> to vector<8x128xbf16>
    %c0_17 = arith.constant 0 : index
    %c0_18 = arith.constant 0 : index
    %24 = vector.load %arg8[%c0_17, %c0_18] : memref<8x128xbf16, #tpu.memory_space<vmem>>, vector<8x128xbf16>
    tpu.vector_store %arg8[%c0_17, %c0_18], %23 {strides = array<i32>} : memref<8x128xbf16, #tpu.memory_space<vmem>>, vector<8x128xbf16>,
    return
  }
  func.func @transform_0(%arg0: i32) -> (i32, i32) {
    %c0_i32 = arith.constant 0 : i32
    %c0_i32_0 = arith.constant 0 : i32
    return %arg0, %c0_i32 : i32, i32
  }
  func.func @transform_1(%arg0: i32) -> (i32, i32) {
    %c0_i32 = arith.constant 0 : i32
    %c0_i32_0 = arith.constant 0 : i32
    %c0_i32_1 = arith.constant 0 : i32
    return %c0_i32, %c0_i32_0 : i32, i32
  }
  func.func @transform_2(%arg0: i32) -> (i32, i32) {
    %c0_i32 = arith.constant 0 : i32
    %c0_i32_0 = arith.constant 0 : i32
    %c0_i32_1 = arith.constant 0 : i32
    return %c0_i32, %c0_i32_0 : i32, i32
  }
  func.func @transform_3(%arg0: i32) -> (i32, i32) {
    %c0_i32 = arith.constant 0 : i32
    %c0_i32_0 = arith.constant 0 : i32
    %c0_i32_1 = arith.constant 0 : i32
    return %c0_i32, %c0_i32_0 : i32, i32
  }
  func.func @transform_4(%arg0: i32) -> (i32, i32) {
    %c0_i32 = arith.constant 0 : i32
    %c0_i32_0 = arith.constant 0 : i32
    %c0_i32_1 = arith.constant 0 : i32
    return %c0_i32, %c0_i32_0 : i32, i32
  }
  func.func @transform_5(%arg0: i32) -> (i32, i32) {
    %c0_i32 = arith.constant 0 : i32
    %c0_i32_0 = arith.constant 0 : i32
    %c0_i32_1 = arith.constant 0 : i32
    return %c0_i32, %c0_i32_0 : i32, i32
  }
  func.func @transform_6(%arg0: i32) -> (i32, i32) {
    %c0_i32 = arith.constant 0 : i32
    %c0_i32_0 = arith.constant 0 : i32
    %c0_i32_1 = arith.constant 0 : i32
    return %c0_i32, %c0_i32_0 : i32, i32
  }
  func.func @transform_7(%arg0: i32) -> (i32, i32) {
    %c0_i32 = arith.constant 0 : i32
    %c0_i32_0 = arith.constant 0 : i32
    return %arg0, %c0_i32 : i32, i32
  }
}

</mosaic_0001>

<llo_original>
// kernel: nn_forward.1
$region0: #{nn_forward.1}
  #allocation0 [shape = 'u32[]', space=smem, size = 0x4, offset = 0x4, fixed_abs, tag = 'smem constant byte address 0x4 - core index']
  #allocation1 [shape = 'u32[144,128]{1,0:T(1,128)}', space=vmem, size = 0x12000, scoped, tag = 'internal scratch']
  %s0 = inlined_call_operand.vmem [shape: f32[8,4], index: 0, kind: input, shape index: {}]
  %s1 = inlined_call_operand.vmem [shape: bf16[4,32], index: 1, kind: input, shape index: {}]
  %s2 = inlined_call_operand.vmem [shape: f32[1,32], index: 2, kind: input, shape index: {}]
  %s3 = inlined_call_operand.vmem [shape: bf16[32,32], index: 3, kind: input, shape index: {}]
  %s4 = inlined_call_operand.vmem [shape: f32[1,32], index: 4, kind: input, shape index: {}]
  %s5 = inlined_call_operand.hbm [shape: bf16[32,128], index: 5, kind: input, shape index: {}]
  %s6 = inlined_call_operand.vmem [shape: f32[1,128], index: 6, kind: input, shape index: {}]
  %s7 = inlined_call_operand.vmem [shape: bf16[8,128], index: 7, kind: output, shape index: {}]
  %s8 = sld [smem:[#allocation0]]
  $region42: #{nn_forward.1} parent=0
    _
  %s10 = ssub.s32 1, %s8
  %s11 = scalar_select 0, %s10, %s8
  $region1: #{nn_forward.1} parent=0
    #allocation2 [shape = 'u8[8192]{0}', space=vmem, size = 0x2000, scoped, tag = 'input window, operand 5, single buffered']
    #allocation3 [shape = 's32[1]{0}', space=sflag, size = 0x4, scoped, tag = 'scoped memory for nn_forward.1']
    %12 = vsyncpa [#allocation3], 0
    // Predicated region
    $region2: #{nn_forward.1} parent=1 // pred_check
      _
    $region3: #{nn_forward.1} parent=1 // pred_check_branch
      %14 = sbr.rel (0) target = $region5
    $region4: #{nn_forward.1} parent=1 // pred_region
      _
    $region5: #{nn_forward.1} parent=1 // pred_fallthru
      _
    // Predicated region
    $region6: #{nn_forward.1} parent=1 // pred_check
      _
    $region7: #{nn_forward.1} parent=1 // pred_check_branch
      %16 = sbr.rel (0) target = $region9
    $region8: #{nn_forward.1} parent=1 // pred_region
      _
    $region9: #{nn_forward.1} parent=1 // pred_fallthru
      _
    // Predicated region
    $region10: #{nn_forward.1} parent=1 // pred_check
      _
    $region11: #{nn_forward.1} parent=1 // pred_check_branch
      %18 = sbr.rel (0) target = $region13
    $region12: #{nn_forward.1} parent=1 // pred_region
      _
    $region13: #{nn_forward.1} parent=1 // pred_fallthru
      _
    // Predicated region
    $region14: #{nn_forward.1} parent=1 // pred_check
      _
    $region15: #{nn_forward.1} parent=1 // pred_check_branch
      %20 = sbr.rel (0) target = $region17
    $region16: #{nn_forward.1} parent=1 // pred_region
      _
    $region17: #{nn_forward.1} parent=1 // pred_fallthru
      _
    // Predicated region
    $region18: #{nn_forward.1} parent=1 // pred_check
      _
    $region19: #{nn_forward.1} parent=1 // pred_check_branch
      %22 = sbr.rel (0) target = $region21
    $region20: #{nn_forward.1} parent=1 // pred_region
      _
    $region21: #{nn_forward.1} parent=1 // pred_fallthru
      _
    // Predicated region
    $region22: #{nn_forward.1} parent=1 // pred_check
      _
    $region23: #{nn_forward.1} parent=1 // pred_check_branch
      %24 = sbr.rel (0) target = $region25
    $region24: #{nn_forward.1} parent=1 // pred_region
      %s26 = ssub.s32 256, 256
      %27 = vsyncadd [#allocation3], %s26
      %s28 = sshll.u32 [#allocation2], 4
      %s29 = int_to_ptr.vmem [resolvable:$true] %s28
      %34 = dma.hbm_to_vmem [thread:$0]  %s5, 256, %s29, [#allocation3], 64, 64, 4
    $region25: #{nn_forward.1} parent=1 // pred_fallthru
      _
    // Predicated region
    $region26: #{nn_forward.1} parent=1 // pred_check
      _
    $region27: #{nn_forward.1} parent=1 // pred_check_branch
      %36 = sbr.rel (0) target = $region29
    $region28: #{nn_forward.1} parent=1 // pred_region
      _
    $region29: #{nn_forward.1} parent=1 // pred_fallthru
      _
    // Predicated region
    $region30: #{nn_forward.1} parent=1 // pred_check
      _
    $region31: #{nn_forward.1} parent=1 // pred_check_branch
      %38 = sbr.rel (0) target = $region33
    $region32: #{nn_forward.1} parent=1 // pred_region
      %39 = dma.done [#allocation3], 256
    $region33: #{nn_forward.1} parent=1 // pred_fallthru
      _
    %v41 = vld [vmem:[%s0] sm:$0xff]
    %v42 = vpack.c.bf16 %v41, %v41
    %v43 = vld [vmem:[%s1] sm:$0x3]
    %v44 = vld [vmem:[%s2] sm:$0x1]
    %v46 = vlaneseq
    %v47 = vshrl.u32 %v46, 7
    %v48 = vsub.s32 0, %v47
    %v49 = vrot.slane %v44, %v48
    %vm51 = vcmask 31744
    %v53 = vsel %vm51, %v42, 0
    %vm55 = vcmask 1041408
    %v57 = vsel %vm55, %v43, 0
    %59 = vmatprep.subr.bf16.mxu0 0
    %60 = vmatpush1.bf16.msra.mxu0 %v57
    %61 = vmatprep.subr.bf16.mxu0 0
    %62 = vmatpush1.bf16.msra.mxu0 0
    %63 = vmatprep.subr.bf16.mxu0 0
    %64 = vmatpush1.bf16.msra.mxu0 0
    %65 = vmatprep.subr.bf16.mxu0 0
    %66 = vmatpush1.bf16.msra.mxu0 0
    %67 = vmatprep.subr.bf16.mxu0 0
    %68 = vmatpush1.bf16.msra.mxu0 0
    %69 = vmatprep.subr.bf16.mxu0 0
    %70 = vmatpush1.bf16.msra.mxu0 0
    %71 = vmatprep.subr.bf16.mxu0 0
    %72 = vmatpush1.bf16.msra.mxu0 0
    %73 = vmatprep.subr.bf16.mxu0 0
    %74 = vmatpush1.bf16.msra.mxu0 0
    %75 = vmatprep.subr.bf16.mxu0 0
    %76 = vmatpush1.bf16.msra.mxu0 0
    %77 = vmatprep.subr.bf16.mxu0 0
    %78 = vmatpush1.bf16.msra.mxu0 0
    %79 = vmatprep.subr.bf16.mxu0 0
    %80 = vmatpush1.bf16.msra.mxu0 0
    %81 = vmatprep.subr.bf16.mxu0 0
    %82 = vmatpush1.bf16.msra.mxu0 0
    %83 = vmatprep.subr.bf16.mxu0 0
    %84 = vmatpush1.bf16.msra.mxu0 0
    %85 = vmatprep.subr.bf16.mxu0 0
    %86 = vmatpush1.bf16.msra.mxu0 0
    %87 = vmatprep.subr.bf16.mxu0 0
    %88 = vmatpush1.bf16.msra.mxu0 0
    %89 = vmatprep.subr.bf16.mxu0 0
    %90 = vmatpush1.bf16.msra.mxu0 0
    %91 = vmatprep.mubr.bf16.mxu0 0
    %92 = vmatmul.mubr.bf16.gmra.mrb[0].mxu0 %v53
    %v93 = vpop.f32.mrb[0].mxu0
    %v94 = vadd.f32 %v49, %v93
    %v95 = vpop.f32.mrb[0].mxu0
    %v96 = vpop.f32.mrb[0].mxu0
    %v97 = vpop.f32.mrb[0].mxu0
    %98 = vdwg.mxu0
    %v99 = vmax.f32 %v94, 0.0
    %v100 = vpack.c.bf16 %v99, %v99
    %v101 = vld [vmem:[%s3] sm:$0xf]
    %v102 = vld [vmem:[%s3 + $0x4] sm:$0xf]
    %v103 = vld [vmem:[%s3 + $0x8] sm:$0xf]
    %v104 = vld [vmem:[%s3 + $0xc] sm:$0xf]
    %v105 = vld [vmem:[%s4] sm:$0x1]
    %v107 = vlaneseq
    %v108 = vshrl.u32 %v107, 7
    %v109 = vsub.s32 0, %v108
    %v110 = vrot.slane %v105, %v109
    %v116 = vunpack.c.l.b16 %v101
    %v117 = vunpack.c.l.b16 %v102
    %v118 = vunpack.c.l.b16 %v103
    %v119 = vunpack.c.l.b16 %v104
    %v120 = vpack.c.b16 %v117, %v116
    %v121 = vpack.c.b16 %v119, %v118
    %vm124 = vcmask 261120
    %v126 = vsel %vm124, %v100, 0
    %128 = vmatprep.subr.bf16.mxu0 0
    %129 = vmatpush1.bf16.msra.mxu0 %v120
    %130 = vmatprep.subr.bf16.mxu0 0
    %131 = vmatpush1.bf16.msra.mxu0 %v121
    %132 = vmatprep.subr.bf16.mxu0 0
    %133 = vmatpush1.bf16.msra.mxu0 0
    %134 = vmatprep.subr.bf16.mxu0 0
    %135 = vmatpush1.bf16.msra.mxu0 0
    %136 = vmatprep.subr.bf16.mxu0 0
    %137 = vmatpush1.bf16.msra.mxu0 0
    %138 = vmatprep.subr.bf16.mxu0 0
    %139 = vmatpush1.bf16.msra.mxu0 0
    %140 = vmatprep.subr.bf16.mxu0 0
    %141 = vmatpush1.bf16.msra.mxu0 0
    %142 = vmatprep.subr.bf16.mxu0 0
    %143 = vmatpush1.bf16.msra.mxu0 0
    %144 = vmatprep.subr.bf16.mxu0 0
    %145 = vmatpush1.bf16.msra.mxu0 0
    %146 = vmatprep.subr.bf16.mxu0 0
    %147 = vmatpush1.bf16.msra.mxu0 0
    %148 = vmatprep.subr.bf16.mxu0 0
    %149 = vmatpush1.bf16.msra.mxu0 0
    %150 = vmatprep.subr.bf16.mxu0 0
    %151 = vmatpush1.bf16.msra.mxu0 0
    %152 = vmatprep.subr.bf16.mxu0 0
    %153 = vmatpush1.bf16.msra.mxu0 0
    %154 = vmatprep.subr.bf16.mxu0 0
    %155 = vmatpush1.bf16.msra.mxu0 0
    %156 = vmatprep.subr.bf16.mxu0 0
    %157 = vmatpush1.bf16.msra.mxu0 0
    %158 = vmatprep.subr.bf16.mxu0 0
    %159 = vmatpush1.bf16.msra.mxu0 0
    %160 = vmatprep.mubr.bf16.mxu0 0
    %161 = vmatmul.mubr.bf16.gmra.mrb[0].mxu0 %v126
    %v162 = vpop.f32.mrb[0].mxu0
    %v163 = vadd.f32 %v110, %v162
    %v164 = vpop.f32.mrb[0].mxu0
    %v165 = vpop.f32.mrb[0].mxu0
    %v166 = vpop.f32.mrb[0].mxu0
    %167 = vdwg.mxu0
    %v168 = vmax.f32 %v163, 0.0
    %v169 = vpack.c.bf16 %v168, %v168
    %v170 = vld [vmem:[#allocation2] sm:$0xf]
    %v171 = vld [vmem:[#allocation2 + $0x4] sm:$0xf]
    %v172 = vld [vmem:[#allocation2 + $0x8] sm:$0xf]
    %v173 = vld [vmem:[#allocation2 + $0xc] sm:$0xf]
    %v174 = vld [vmem:[%s6] sm:$0x1]
    %v176 = vlaneseq
    %v177 = vshrl.u32 %v176, 7
    %v178 = vsub.s32 0, %v177
    %v179 = vrot.slane %v174, %v178
    %v185 = vunpack.c.l.b16 %v170
    %v186 = vunpack.c.l.b16 %v171
    %v187 = vunpack.c.l.b16 %v172
    %v188 = vunpack.c.l.b16 %v173
    %v189 = vpack.c.b16 %v186, %v185
    %v190 = vpack.c.b16 %v188, %v187
    %v194 = vsel %vm124, %v169, 0
    %196 = vmatprep.subr.bf16.mxu0 0
    %197 = vmatpush1.bf16.msra.mxu0 %v189
    %198 = vmatprep.subr.bf16.mxu0 0
    %199 = vmatpush1.bf16.msra.mxu0 %v190
    %200 = vmatprep.subr.bf16.mxu0 0
    %201 = vmatpush1.bf16.msra.mxu0 0
    %202 = vmatprep.subr.bf16.mxu0 0
    %203 = vmatpush1.bf16.msra.mxu0 0
    %204 = vmatprep.subr.bf16.mxu0 0
    %205 = vmatpush1.bf16.msra.mxu0 0
    %206 = vmatprep.subr.bf16.mxu0 0
    %207 = vmatpush1.bf16.msra.mxu0 0
    %208 = vmatprep.subr.bf16.mxu0 0
    %209 = vmatpush1.bf16.msra.mxu0 0
    %210 = vmatprep.subr.bf16.mxu0 0
    %211 = vmatpush1.bf16.msra.mxu0 0
    %212 = vmatprep.subr.bf16.mxu0 0
    %213 = vmatpush1.bf16.msra.mxu0 0
    %214 = vmatprep.subr.bf16.mxu0 0
    %215 = vmatpush1.bf16.msra.mxu0 0
    %216 = vmatprep.subr.bf16.mxu0 0
    %217 = vmatpush1.bf16.msra.mxu0 0
    %218 = vmatprep.subr.bf16.mxu0 0
    %219 = vmatpush1.bf16.msra.mxu0 0
    %220 = vmatprep.subr.bf16.mxu0 0
    %221 = vmatpush1.bf16.msra.mxu0 0
    %222 = vmatprep.subr.bf16.mxu0 0
    %223 = vmatpush1.bf16.msra.mxu0 0
    %224 = vmatprep.subr.bf16.mxu0 0
    %225 = vmatpush1.bf16.msra.mxu0 0
    %226 = vmatprep.subr.bf16.mxu0 0
    %227 = vmatpush1.bf16.msra.mxu0 0
    %228 = vmatprep.mubr.bf16.mxu0 0
    %229 = vmatmul.mubr.bf16.gmra.mrb[0].mxu0 %v194
    %v230 = vpop.f32.mrb[0].mxu0
    %v231 = vadd.f32 %v179, %v230
    %v232 = vpop.f32.mrb[0].mxu0
    %v233 = vpop.f32.mrb[0].mxu0
    %v234 = vpop.f32.mrb[0].mxu0
    %235 = vdwg.mxu0
    %v236 = vpack.c.bf16 %v231, %v231
    %237 = vst [vmem:[%s7] sm:$0xf] %v236
    // Predicated region
    $region34: #{nn_forward.1} parent=1 // pred_check
      _
    $region35: #{nn_forward.1} parent=1 // pred_check_branch
      %239 = sbr.rel (0) target = $region37
    $region36: #{nn_forward.1} parent=1 // pred_region
      _
    $region37: #{nn_forward.1} parent=1 // pred_fallthru
      _
    // Predicated region
    $region38: #{nn_forward.1} parent=1 // pred_check
      _
    $region39: #{nn_forward.1} parent=1 // pred_check_branch
      %241 = sbr.rel (0) target = $region41
    $region40: #{nn_forward.1} parent=1 // pred_region
      _
    $region41: #{nn_forward.1} parent=1 // pred_fallthru
      _
    %242 = vsyncpa [#allocation3], 1

</llo_original>
